<compile_context>
chip_gen: v6e
topology: v6e:2x2x1
jax: 0.10.0
libtpu: 0.0.40
codegen_flags: <defaults>
</compile_context>

<pallas_src>
import functools
import math

import jax
import jax.numpy as jnp
from jax import lax
from jax.experimental import pallas as pl
from jax.experimental.pallas import tpu as pltpu

# dot_general dims for A[m, k] x B[n, k] -> [m, n] (contract on last dim of both).
_TRANS_B_DIMS = (((1,), (1,)), ((), ()))

_ACT_VMEM_BUDGET = 6 << 20   # bytes budgeted for x double-buffer + f32 intermediates
_MAX_TILE = 8192
_LANE = 128


# ----------------------------------------------------------------------------- helpers
def _device_kind():
    try:
        return jax.devices()[0].device_kind.lower()
    except Exception:
        return ""


def _resolve_compute_dtype(compute_dtype, kind=None):
    """Gate bf16 off on v5e (no bf16 VPU); otherwise honor the request."""
    if kind is None:
        kind = _device_kind()
    cd = jnp.dtype(compute_dtype)
    if cd == jnp.dtype(jnp.bfloat16) and ("v5e" in kind or "v5 lite" in kind
                                          or "v5lite" in kind):
        return jnp.dtype(jnp.float32)
    return cd


def _choose_tile(B, in_dim, H, two_core):
    """Pick a batch tile: big enough to amortize per-step overhead, small enough
    to keep the x double-buffer + [H, tile] f32 intermediates inside the VMEM
    budget, and (on v7x) small enough that the parallel grid has >= 2 steps."""
    row_bytes = 4 * (2 * in_dim + 3 * H)
    tile = (_ACT_VMEM_BUDGET // max(row_bytes, 1)) // _LANE * _LANE
    tile = max(_LANE, min(_MAX_TILE, tile))
    if two_core and B >= 2 * _LANE:
        tile = min(tile, max(_LANE, (B // 2) // _LANE * _LANE))
    if tile >= B:
        return B            # single full-extent block (no 128 constraint needed)
    return tile


def _vmem_limit(tile, in_dim, H, x_itemsize, w_itemsize, single_buffer_weights, kind):
    """Explicit scoped-VMEM budget; sized against v7x's 64 MiB when detected."""
    wbuf = 1 if single_buffer_weights else 2
    Hp = max(H, 8)
    need = (2 * tile * in_dim * x_itemsize                      # double-buffered x tile
            + wbuf * (H * in_dim + H * H + H) * w_itemsize      # resident weights
            + wbuf * 2 * Hp * _LANE * 4                         # (H,1) biases (lane-padded)
            + 2 * 8 * tile * 4                                  # (1,tile) out blocks, sublane-padded
            + 3 * Hp * tile * 4                                 # f32 [H, tile] intermediates
            + (4 << 20))                                        # compiler scratch headroom
    cap = (48 << 20) if "v7" in kind else (100 << 20)
    return int(min(max(need, 16 << 20), cap))


def _const_spec(shape, single_buffer):
    """BlockSpec for a grid-invariant (resident) operand; single-buffer it when
    requested and the running jax supports pipeline_mode=Buffered."""
    index_map = lambda i: (0,) * len(shape)
    if single_buffer and hasattr(pl, "Buffered"):
        try:
            return pl.BlockSpec(shape, index_map, pipeline_mode=pl.Buffered(1))
        except TypeError:
            pass
    return pl.BlockSpec(shape, index_map)


# ----------------------------------------------------------------------------- kernel
def _mlp_kernel(x_ref, w1_ref, b1_ref, w2_ref, b2_ref, w3_ref, b3_ref, o_ref,
                *, compute_dtype):
    """Fused 3-layer MLP on one batch tile; activations are [H, tile] (lane-dense)."""
    neg = jnp.float32(0.01)                     # PyTorch nn.LeakyReLU default slope

    x = x_ref[...].astype(compute_dtype)        # [tile, in]

    # Layer 1: w1[H, in] . x[tile, in]^T -> [H, tile]  (f32 accumulate on the MXU)
    h = lax.dot_general(w1_ref[...], x, dimension_numbers=_TRANS_B_DIMS,
                        preferred_element_type=jnp.float32)
    h = h + b1_ref[...]                         # [H, 1] broadcast across lanes
    h = jnp.where(h > 0, h, neg * h)

    # Layer 2: w2[H, H] @ h[H, tile] -> [H, tile]
    h = jnp.dot(w2_ref[...], h.astype(compute_dtype),
                preferred_element_type=jnp.float32)
    h = h + b2_ref[...]
    h = jnp.where(h > 0, h, neg * h)

    # Layer 3 (Linear(H, 1)): w3[1, H] @ h[H, tile] -> lane-dense [1, tile]
    out = jnp.dot(w3_ref[...], h.astype(compute_dtype),
                  preferred_element_type=jnp.float32)
    out = out + b3_ref[0, 0]                    # scalar bias from SMEM
    o_ref[...] = out.astype(o_ref.dtype)


def _run_tiles(x, *, rows, tile, w1, b1, w2, b2, w3, b3,
               compute_dtype, single_buffer_weights, vmem_limit_bytes):
    """One pallas_call covering the first `rows` rows of x with `tile`-row steps
    (tile must divide rows). Returns a lane-dense (1, rows) f32 row."""
    _, in_dim = x.shape
    H = w1.shape[0]
    grid = (rows // tile,)

    in_specs = [
        pl.BlockSpec((tile, in_dim), lambda i: (i, 0)),          # x: tiled, pipelined
        _const_spec((H, in_dim), single_buffer_weights),         # w1 (resident)
        _const_spec((H, 1), single_buffer_weights),              # b1
        _const_spec((H, H), single_buffer_weights),              # w2
        _const_spec((H, 1), single_buffer_weights),              # b2
        _const_spec((1, H), single_buffer_weights),              # w3
        pl.BlockSpec(memory_space=pltpu.MemorySpace.SMEM),       # b3 scalar in SMEM
    ]
    out_specs = pl.BlockSpec((1, tile), lambda i: (0, i))        # lane-dense output row

    flops = 2 * rows * (in_dim * H + H * H + H)
    bytes_accessed = (rows * in_dim * x.dtype.itemsize
                      + (w1.size + w2.size + w3.size) * w1.dtype.itemsize
                      + (b1.size + b2.size + b3.size) * 4
                      + rows * 4)

    return pl.pallas_call(
        functools.partial(_mlp_kernel, compute_dtype=compute_dtype),
        out_shape=jax.ShapeDtypeStruct((1, rows), jnp.float32),
        grid=grid,
        in_specs=in_specs,
        out_specs=out_specs,
        compiler_params=pltpu.CompilerParams(
            dimension_semantics=("parallel",),
            vmem_limit_bytes=vmem_limit_bytes,
        ),
        cost_estimate=pl.CostEstimate(
            flops=int(flops), transcendentals=0, bytes_accessed=int(bytes_accessed)),
    )(x, w1, b1, w2, b2, w3, b3)


# ----------------------------------------------------------------------------- wrapper
def iw_discriminator_forward(x, params, *, batch_tile=None,
                             compute_dtype=jnp.float32,
                             single_buffer_weights=None):
    """IWDiscriminator.forward(x) == MLP(in_dim, 1, H, depth=3)(x).

    x:       [B, in_dim] float32
    params:  native PyTorch layouts — w1 [H, in_dim], b1 [H, 1],
             w2 [H, H], b2 [H, 1], w3 [1, H], b3 [1, 1]
    returns: [B, 1] float32
    """
    B, in_dim = x.shape
    H, in_dim_w = params["w1"].shape
    assert in_dim_w == in_dim, "w1 must be [H, in_dim] (native PyTorch layout)"

    kind = _device_kind()
    cd = _resolve_compute_dtype(compute_dtype, kind)

    # Pre-cast weights ONCE in the wrapper (never per grid step inside the kernel).
    w1 = params["w1"].astype(cd)
    w2 = params["w2"].astype(cd)
    w3 = params["w3"].astype(cd)
    b1 = params["b1"].astype(jnp.float32)
    b2 = params["b2"].astype(jnp.float32)
    b3 = params["b3"].astype(jnp.float32)

    weight_bytes = (w1.size + w2.size + w3.size) * jnp.dtype(cd).itemsize
    if single_buffer_weights is None:
        # Only bother single-buffering the resident weights when they are large
        # enough for the VMEM saving to matter (large H, esp. v7x's 64 MiB VMEM).
        single_buffer_weights = weight_bytes > (2 << 20)

    two_core = "v7" in kind
    if batch_tile is None:
        tile = _choose_tile(B, in_dim, H, two_core)
    else:
        tile = int(batch_tile)
        tile = B if tile >= B else max(_LANE, tile // _LANE * _LANE)

    n_main = B // tile * tile
    rem = B - n_main

    vmem_limit = _vmem_limit(tile, in_dim, H, x.dtype.itemsize,
                             jnp.dtype(cd).itemsize, single_buffer_weights, kind)

    run = functools.partial(
        _run_tiles, w1=w1, b1=b1, w2=w2, b2=b2, w3=w3, b3=b3,
        compute_dtype=cd, single_buffer_weights=single_buffer_weights,
        vmem_limit_bytes=vmem_limit)

    pieces = []
    if n_main > 0:
        # Pass x unmodified; the grid only covers the divisible prefix (no jnp.pad
        # HBM round-trip).
        pieces.append(run(x, rows=n_main, tile=tile))
    if rem > 0:
        # Ragged tail: one extra small call with full-extent blocks; only the tail
        # rows are sliced/copied.
        x_tail = lax.slice(x, (n_main, 0), (B, in_dim))
        pieces.append(run(x_tail, rows=rem, tile=rem))

    out_row = pieces[0] if len(pieces) == 1 else jnp.concatenate(pieces, axis=1)
    # (1, B) lane-dense row -> (B, 1) column.
    return out_row.reshape(B, 1)


# ----------------------------------------------------------------------------- init / reference
def init_params(key, in_dim, hidden):
    """nn.Linear default init (U[-1/sqrt(fan_in), 1/sqrt(fan_in)]), native
    PyTorch [out, in] weight layout; biases stored as [out, 1]."""
    ks = jax.random.split(key, 6)

    def uniform(k, shape, fan_in):
        bound = 1.0 / math.sqrt(fan_in)
        return jax.random.uniform(k, shape, jnp.float32, -bound, bound)

    return {
        "w1": uniform(ks[0], (hidden, in_dim), in_dim),
        "b1": uniform(ks[1], (hidden, 1), in_dim),
        "w2": uniform(ks[2], (hidden, hidden), hidden),
        "b2": uniform(ks[3], (hidden, 1), hidden),
        "w3": uniform(ks[4], (1, hidden), hidden),
        "b3": uniform(ks[5], (1, 1), hidden),
    }


def reference_forward(x, params, compute_dtype=jnp.float32):
    """Pure-JAX reference (PyTorch MLP semantics). compute_dtype emulates the
    kernel's operand rounding (f32 accumulation, f32 bias/LeakyReLU)."""
    cd = jnp.dtype(compute_dtype)
    w1 = params["w1"].astype(cd)
    w2 = params["w2"].astype(cd)
    w3 = params["w3"].astype(cd)
    h = jnp.dot(x.astype(cd), w1.T, preferred_element_type=jnp.float32) + params["b1"][:, 0]
    h = jnp.where(h > 0, h, 0.01 * h)
    h = jnp.dot(h.astype(cd), w2.T, preferred_element_type=jnp.float32) + params["b2"][:, 0]
    h = jnp.where(h > 0, h, 0.01 * h)
    out = jnp.dot(h.astype(cd), w3.T, preferred_element_type=jnp.float32) + params["b3"][0, 0]
    return out


# ----------------------------------------------------------------------------- test
if __name__ == "__main__":
    # Small shapes consistent with the module:
    # hparams = {num_hidden: 32, depth: 3, spectral: False}, in_dim = 32.
    B, IN_DIM, HIDDEN = 8, 32, 32

    key = jax.random.PRNGKey(0)
    k_x, k_p, k_x2 = jax.random.split(key, 3)

    x = jax.random.normal(k_x, (B, IN_DIM), dtype=jnp.float32)
    params = init_params(k_p, IN_DIM, HIDDEN)
    ref = reference_forward(x, params)

    # 1) f32 path, single full-extent block.
    out = jax.block_until_ready(iw_discriminator_forward(x, params))
    assert out.shape == (B, 1)
    assert jnp.allclose(out, ref, atol=1e-4, rtol=1e-4), "f32 mismatch vs reference"

    # 2) multi-step + ragged-tail path: 300 rows with a forced 128-row tile ->
    #    main call with 2 lane-dense 128-wide steps + a 44-row tail call (no pad).
    B2 = 300
    x2 = jax.random.normal(k_x2, (B2, IN_DIM), dtype=jnp.float32)
    out2 = jax.block_until_ready(
        iw_discriminator_forward(x2, params, batch_tile=128))
    ref2 = reference_forward(x2, params)
    assert out2.shape == (B2, 1)
    assert jnp.allclose(out2, ref2, atol=1e-4, rtol=1e-4), "tiled mismatch vs reference"

    # 3) bf16 MXU-operand path (auto-disabled on v5e). Compare against a reference
    #    that applies the same operand rounding so the tolerance stays meaningful.
    actual_cd = _resolve_compute_dtype(jnp.bfloat16)
    out_b = jax.block_until_ready(
        iw_discriminator_forward(x, params, compute_dtype=jnp.bfloat16))
    ref_b = reference_forward(x, params, compute_dtype=actual_cd)
    tol = 1e-4 if actual_cd == jnp.dtype(jnp.float32) else 2e-2
    assert out_b.shape == (B, 1)
    assert jnp.allclose(out_b, ref_b, atol=tol, rtol=tol), "bf16 mismatch vs reference"

    print("KERNEL_OK")
</pallas_src>

<mosaic_0001>
module attributes {stable_mosaic.version = 11 : i64} {
  func.func @_mlp_kernel(%arg0: i32, %arg1: memref<8x32xf32, #tpu.memory_space<vmem>>, %arg2: memref<32x32xf32, #tpu.memory_space<vmem>>, %arg3: memref<32x1xf32, #tpu.memory_space<vmem>>, %arg4: memref<32x32xf32, #tpu.memory_space<vmem>>, %arg5: memref<32x1xf32, #tpu.memory_space<vmem>>, %arg6: memref<1x32xf32, #tpu.memory_space<vmem>>, %arg7: memref<1x1xf32, #tpu.memory_space<smem>>, %arg8: memref<1x8xf32, #tpu.memory_space<vmem>>) attributes {dimension_semantics = [#tpu.dimension_semantics<parallel>], iteration_bounds = array<i64: 1>, scalar_prefetch = 0 : i64, scratch_operands = 0 : i64, tpu.core_type = #tpu.core_type<tc>, window_params = [{transform_indices = @transform_0, window_bounds = array<i64: 8, 32>}, {pipeline_mode = #tpu.pipeline_mode<synchronous>, transform_indices = @transform_1, window_bounds = array<i64: 32, 32>}, {pipeline_mode = #tpu.pipeline_mode<synchronous>, transform_indices = @transform_2, window_bounds = array<i64: 32, 1>}, {pipeline_mode = #tpu.pipeline_mode<synchronous>, transform_indices = @transform_3, window_bounds = array<i64: 32, 32>}, {pipeline_mode = #tpu.pipeline_mode<synchronous>, transform_indices = @transform_4, window_bounds = array<i64: 32, 1>}, {pipeline_mode = #tpu.pipeline_mode<synchronous>, transform_indices = @transform_5, window_bounds = array<i64: 1, 32>}, {transform_indices = @transform_6, window_bounds = array<i64: 1, 1>}, {transform_indices = @transform_7, window_bounds = array<i64: 1, 8>}]} {
    %c0 = arith.constant 0 : index
    %c0_0 = arith.constant 0 : index
    %0 = vector.load %arg1[%c0, %c0_0] : memref<8x32xf32, #tpu.memory_space<vmem>>, vector<8x32xf32>
    %c0_1 = arith.constant 0 : index
    %c0_2 = arith.constant 0 : index
    %1 = vector.load %arg2[%c0_1, %c0_2] : memref<32x32xf32, #tpu.memory_space<vmem>>, vector<32x32xf32>
    %cst = arith.constant dense<0.000000e+00> : vector<32x8xf32>
    %2 = tpu.matmul %1, %0, %cst {dimension_numbers = #tpu.dot_dimension_numbers<[1], [1], [0], [0], [0, 0, 1, 0], [], []>} : vector<32x32xf32>, vector<8x32xf32>, vector<32x8xf32> -> vector<32x8xf32>
    %c0_3 = arith.constant 0 : index
    %c0_4 = arith.constant 0 : index
    %3 = vector.load %arg3[%c0_3, %c0_4] : memref<32x1xf32, #tpu.memory_space<vmem>>, vector<32x1xf32>
    %4 = vector.broadcast %3 : vector<32x1xf32> to vector<32x8xf32>
    %5 = arith.addf %2, %4 : vector<32x8xf32>
    %cst_5 = arith.constant 0.000000e+00 : f32
    %6 = vector.broadcast %cst_5 : f32 to vector<32x8xf32>
    %7 = arith.cmpf ogt, %5, %6 : vector<32x8xf32>
    %cst_6 = arith.constant 0.00999999977 : f32
    %8 = vector.broadcast %cst_6 : f32 to vector<32x8xf32>
    %9 = arith.mulf %8, %5 : vector<32x8xf32>
    %10 = arith.select %7, %5, %9 : vector<32x8xi1>, vector<32x8xf32>
    %c0_7 = arith.constant 0 : index
    %c0_8 = arith.constant 0 : index
    %11 = vector.load %arg4[%c0_7, %c0_8] : memref<32x32xf32, #tpu.memory_space<vmem>>, vector<32x32xf32>
    %cst_9 = arith.constant dense<0.000000e+00> : vector<32x8xf32>
    %12 = tpu.matmul %11, %10, %cst_9 {dimension_numbers = #tpu.dot_dimension_numbers<[1], [0], [0], [1], [0, 0, 1, 1], [], []>} : vector<32x32xf32>, vector<32x8xf32>, vector<32x8xf32> -> vector<32x8xf32>
    %c0_10 = arith.constant 0 : index
    %c0_11 = arith.constant 0 : index
    %13 = vector.load %arg5[%c0_10, %c0_11] : memref<32x1xf32, #tpu.memory_space<vmem>>, vector<32x1xf32>
    %14 = vector.broadcast %13 : vector<32x1xf32> to vector<32x8xf32>
    %15 = arith.addf %12, %14 : vector<32x8xf32>
    %cst_12 = arith.constant 0.000000e+00 : f32
    %16 = vector.broadcast %cst_12 : f32 to vector<32x8xf32>
    %17 = arith.cmpf ogt, %15, %16 : vector<32x8xf32>
    %cst_13 = arith.constant 0.00999999977 : f32
    %18 = vector.broadcast %cst_13 : f32 to vector<32x8xf32>
    %19 = arith.mulf %18, %15 : vector<32x8xf32>
    %20 = arith.select %17, %15, %19 : vector<32x8xi1>, vector<32x8xf32>
    %c0_14 = arith.constant 0 : index
    %c0_15 = arith.constant 0 : index
    %21 = vector.load %arg6[%c0_14, %c0_15] : memref<1x32xf32, #tpu.memory_space<vmem>>, vector<1x32xf32>
    %cst_16 = arith.constant dense<0.000000e+00> : vector<1x8xf32>
    %22 = tpu.matmul %21, %20, %cst_16 {dimension_numbers = #tpu.dot_dimension_numbers<[1], [0], [0], [1], [0, 0, 1, 1], [], []>} : vector<1x32xf32>, vector<32x8xf32>, vector<1x8xf32> -> vector<1x8xf32>
    %c0_17 = arith.constant 0 : index
    %c0_18 = arith.constant 0 : index
    %23 = memref.load %arg7[%c0_17, %c0_18] : memref<1x1xf32, #tpu.memory_space<smem>>
    %24 = vector.broadcast %23 : f32 to vector<1x8xf32>
    %25 = arith.addf %22, %24 : vector<1x8xf32>
    %c0_19 = arith.constant 0 : index
    %c0_20 = arith.constant 0 : index
    %26 = vector.load %arg8[%c0_19, %c0_20] : memref<1x8xf32, #tpu.memory_space<vmem>>, vector<1x8xf32>
    tpu.vector_store %arg8[%c0_19, %c0_20], %25 {strides = array<i32>} : memref<1x8xf32, #tpu.memory_space<vmem>>, vector<1x8xf32>,
    return
  }
  func.func @transform_0(%arg0: i32) -> (i32, i32) {
    %c0_i32 = arith.constant 0 : i32
    %c0_i32_0 = arith.constant 0 : i32
    return %arg0, %c0_i32 : i32, i32
  }
  func.func @transform_1(%arg0: i32) -> (i32, i32) {
    %c0_i32 = arith.constant 0 : i32
    %c0_i32_0 = arith.constant 0 : i32
    %c0_i32_1 = arith.constant 0 : i32
    return %c0_i32, %c0_i32_0 : i32, i32
  }
  func.func @transform_2(%arg0: i32) -> (i32, i32) {
    %c0_i32 = arith.constant 0 : i32
    %c0_i32_0 = arith.constant 0 : i32
    %c0_i32_1 = arith.constant 0 : i32
    return %c0_i32, %c0_i32_0 : i32, i32
  }
  func.func @transform_3(%arg0: i32) -> (i32, i32) {
    %c0_i32 = arith.constant 0 : i32
    %c0_i32_0 = arith.constant 0 : i32
    %c0_i32_1 = arith.constant 0 : i32
    return %c0_i32, %c0_i32_0 : i32, i32
  }
  func.func @transform_4(%arg0: i32) -> (i32, i32) {
    %c0_i32 = arith.constant 0 : i32
    %c0_i32_0 = arith.constant 0 : i32
    %c0_i32_1 = arith.constant 0 : i32
    return %c0_i32, %c0_i32_0 : i32, i32
  }
  func.func @transform_5(%arg0: i32) -> (i32, i32) {
    %c0_i32 = arith.constant 0 : i32
    %c0_i32_0 = arith.constant 0 : i32
    %c0_i32_1 = arith.constant 0 : i32
    return %c0_i32, %c0_i32_0 : i32, i32
  }
  func.func @transform_6(%arg0: i32) -> (i32, i32) {
    %c0_i32 = arith.constant 0 : i32
    %c0_i32_0 = arith.constant 0 : i32
    %c0_i32_1 = arith.constant 0 : i32
    return %c0_i32, %c0_i32_0 : i32, i32
  }
  func.func @transform_7(%arg0: i32) -> (i32, i32) {
    %c0_i32 = arith.constant 0 : i32
    %c0_i32_0 = arith.constant 0 : i32
    return %c0_i32, %arg0 : i32, i32
  }
}

</mosaic_0001>

<llo_original>
// kernel: tpu_custom_call.1
$region0: #{tpu_custom_call.1}
  #allocation0 [shape = 'u32[]', space=smem, size = 0x4, offset = 0x4, fixed_abs, tag = 'smem constant byte address 0x4 - core index']
  #allocation1 [shape = 'u32[144,128]{1,0:T(1,128)}', space=vmem, size = 0x12000, scoped, tag = 'internal scratch']
  #allocation2 [shape = 'f32[1,1]{1,0:T(1,128)S(6)}', space=smem, size = 0x200, scoped, tag = 'scoped memory for tpu_custom_call.1']
  %s0 = inlined_call_operand.hbm [shape: f32[8,32], index: 0, kind: input, shape index: {}]
  %s1 = inlined_call_operand.vmem [shape: f32[32,32], index: 1, kind: input, shape index: {}]
  %s2 = inlined_call_operand.vmem [shape: f32[32,1], index: 2, kind: input, shape index: {}]
  %s3 = inlined_call_operand.vmem [shape: f32[32,32], index: 3, kind: input, shape index: {}]
  %s4 = inlined_call_operand.vmem [shape: f32[32,1], index: 4, kind: input, shape index: {}]
  %s5 = inlined_call_operand.vmem [shape: f32[1,32], index: 5, kind: input, shape index: {}]
  %s6 = inlined_call_operand.<no memory space> [shape: f32[1,1], index: 6, kind: input, shape index: {}]
  %s7 = inlined_call_operand.hbm [shape: f32[1,8], index: 7, kind: output, shape index: {}]
  %s8 = sld [smem:[#allocation0]]
  $region42: #{tpu_custom_call.1} parent=0
    _
  %s10 = ssub.s32 1, %s8
  %s11 = scalar_select 0, %s10, %s8
  %12 = sst [smem:[#allocation2]] %s6
  $region1: #{tpu_custom_call.1} parent=0
    #allocation3 [shape = 'u8[4096]{0}', space=vmem, size = 0x1000, scoped, tag = 'input window, operand 0, single buffered']
    #allocation4 [shape = 's32[1]{0}', space=sflag, size = 0x4, scoped, tag = 'scoped memory for tpu_custom_call.1']
    #allocation5 [shape = 's32[1]{0}', space=sflag, size = 0x4, scoped, tag = 'scoped memory for tpu_custom_call.1']
    #allocation6 [shape = 'u8[512]{0}', space=vmem, size = 0x400, scoped, tag = 'output window, operand 0, single buffered']
    %13 = vsyncpa [#allocation4], 0
    %14 = vsyncpa [#allocation5], 0
    // Predicated region
    $region2: #{tpu_custom_call.1} parent=1 // pred_check
      _
    $region3: #{tpu_custom_call.1} parent=1 // pred_check_branch
      %16 = sbr.rel (0) target = $region5
    $region4: #{tpu_custom_call.1} parent=1 // pred_region
      %s18 = ssub.s32 128, 128
      %19 = vsyncadd [#allocation4], %s18
      %s21 = sshll.u32 [#allocation3], 4
      %s22 = int_to_ptr.vmem [resolvable:$true] %s21
      %24 = dma.hbm_to_vmem [thread:$0]  %s0, 128, %s22, [#allocation4]
    $region5: #{tpu_custom_call.1} parent=1 // pred_fallthru
      _
    // Predicated region
    $region6: #{tpu_custom_call.1} parent=1 // pred_check
      _
    $region7: #{tpu_custom_call.1} parent=1 // pred_check_branch
      %26 = sbr.rel (0) target = $region9
    $region8: #{tpu_custom_call.1} parent=1 // pred_region
      _
    $region9: #{tpu_custom_call.1} parent=1 // pred_fallthru
      _
    // Predicated region
    $region10: #{tpu_custom_call.1} parent=1 // pred_check
      _
    $region11: #{tpu_custom_call.1} parent=1 // pred_check_branch
      %28 = sbr.rel (0) target = $region13
    $region12: #{tpu_custom_call.1} parent=1 // pred_region
      _
    $region13: #{tpu_custom_call.1} parent=1 // pred_fallthru
      _
    // Predicated region
    $region14: #{tpu_custom_call.1} parent=1 // pred_check
      _
    $region15: #{tpu_custom_call.1} parent=1 // pred_check_branch
      %30 = sbr.rel (0) target = $region17
    $region16: #{tpu_custom_call.1} parent=1 // pred_region
      _
    $region17: #{tpu_custom_call.1} parent=1 // pred_fallthru
      _
    // Predicated region
    $region18: #{tpu_custom_call.1} parent=1 // pred_check
      _
    $region19: #{tpu_custom_call.1} parent=1 // pred_check_branch
      %32 = sbr.rel (0) target = $region21
    $region20: #{tpu_custom_call.1} parent=1 // pred_region
      _
    $region21: #{tpu_custom_call.1} parent=1 // pred_fallthru
      _
    // Predicated region
    $region22: #{tpu_custom_call.1} parent=1 // pred_check
      _
    $region23: #{tpu_custom_call.1} parent=1 // pred_check_branch
      %34 = sbr.rel (0) target = $region25
    $region24: #{tpu_custom_call.1} parent=1 // pred_region
      _
    $region25: #{tpu_custom_call.1} parent=1 // pred_fallthru
      _
    // Predicated region
    $region26: #{tpu_custom_call.1} parent=1 // pred_check
      _
    $region27: #{tpu_custom_call.1} parent=1 // pred_check_branch
      %36 = sbr.rel (0) target = $region29
    $region28: #{tpu_custom_call.1} parent=1 // pred_region
      _
    $region29: #{tpu_custom_call.1} parent=1 // pred_fallthru
      _
    // Predicated region
    $region30: #{tpu_custom_call.1} parent=1 // pred_check
      _
    $region31: #{tpu_custom_call.1} parent=1 // pred_check_branch
      %38 = sbr.rel (0) target = $region33
    $region32: #{tpu_custom_call.1} parent=1 // pred_region
      %39 = dma.done [#allocation4], 128
    $region33: #{tpu_custom_call.1} parent=1 // pred_fallthru
      _
    %v40 = vld [vmem:[#allocation3] sm:$0xff]
    %v41 = vld [vmem:[%s1] sm:$0xff]
    %v42 = vld [vmem:[%s1 + $0x8] sm:$0xff]
    %v43 = vld [vmem:[%s1 + $0x10] sm:$0xff]
    %v44 = vld [vmem:[%s1 + $0x18] sm:$0xff]
    %v45 = vld [vmem:[%s2] sm:$0xff]
    %v46 = vld [vmem:[%s2 + $0x8] sm:$0xff]
    %v47 = vld [vmem:[%s2 + $0x10] sm:$0xff]
    %v48 = vld [vmem:[%s2 + $0x18] sm:$0xff]
    %50 = vset.pattern.permute.xlu0 0
    %51 = vperm.xlu0 %50, %v45
    %v52 = vpop.permute.xlu0 %51
    %55 = vset.pattern.permute.xlu0 0
    %56 = vperm.xlu0 %55, %v46
    %v57 = vpop.permute.xlu0 %56
    %60 = vset.pattern.permute.xlu0 0
    %61 = vperm.xlu0 %60, %v47
    %v62 = vpop.permute.xlu0 %61
    %65 = vset.pattern.permute.xlu0 0
    %66 = vperm.xlu0 %65, %v48
    %v67 = vpop.permute.xlu0 %66
    %vm69 = vcmask 261120
    %v71 = vsel %vm69, %v41, 0
    %v74 = vsel %vm69, %v42, 0
    %v77 = vsel %vm69, %v43, 0
    %v80 = vsel %vm69, %v44, 0
    %v83 = vsel %vm69, %v40, 0
    %85 = vmatprep.subr.mxu0 0.0
    %86 = vmatpush1.xpose.msra.mxu0 0.0
    %87 = vmatprep.subr.mxu0 0.0
    %88 = vmatpush1.xpose.msra.mxu0 0.0
    %89 = vmatprep.subr.mxu0 0.0
    %90 = vmatpush1.xpose.msra.mxu0 0.0
    %91 = vmatprep.subr.mxu0 0.0
    %92 = vmatpush1.xpose.msra.mxu0 0.0
    %93 = vmatprep.subr.mxu0 0.0
    %94 = vmatpush1.xpose.msra.mxu0 0.0
    %95 = vmatprep.subr.mxu0 0.0
    %96 = vmatpush1.xpose.msra.mxu0 0.0
    %97 = vmatprep.subr.mxu0 0.0
    %98 = vmatpush1.xpose.msra.mxu0 0.0
    %99 = vmatprep.subr.mxu0 0.0
    %100 = vmatpush1.xpose.msra.mxu0 0.0
    %101 = vmatprep.subr.mxu0 0.0
    %102 = vmatpush1.xpose.msra.mxu0 0.0
    %103 = vmatprep.subr.mxu0 0.0
    %104 = vmatpush1.xpose.msra.mxu0 0.0
    %105 = vmatprep.subr.mxu0 0.0
    %106 = vmatpush1.xpose.msra.mxu0 0.0
    %107 = vmatprep.subr.mxu0 0.0
    %108 = vmatpush1.xpose.msra.mxu0 0.0
    %109 = vmatprep.subr.mxu0 0.0
    %110 = vmatpush1.xpose.msra.mxu0 0.0
    %111 = vmatprep.subr.mxu0 0.0
    %112 = vmatpush1.xpose.msra.mxu0 0.0
    %113 = vmatprep.subr.mxu0 0.0
    %114 = vmatpush1.xpose.msra.mxu0 0.0
    %115 = vmatprep.subr.mxu0 0.0
    %116 = vmatpush1.xpose.msra.mxu0 %v83
    %117 = vmatprep.subr.mxu0 0.0
    %118 = vmatpush2.xpose.msra.mxu0 0.0
    %119 = vmatprep.subr.mxu0 0.0
    %120 = vmatpush2.xpose.msra.mxu0 0.0
    %121 = vmatprep.subr.mxu0 0.0
    %122 = vmatpush2.xpose.msra.mxu0 0.0
    %123 = vmatprep.subr.mxu0 0.0
    %124 = vmatpush2.xpose.msra.mxu0 0.0
    %125 = vmatprep.subr.mxu0 0.0
    %126 = vmatpush2.xpose.msra.mxu0 0.0
    %127 = vmatprep.subr.mxu0 0.0
    %128 = vmatpush2.xpose.msra.mxu0 0.0
    %129 = vmatprep.subr.mxu0 0.0
    %130 = vmatpush2.xpose.msra.mxu0 0.0
    %131 = vmatprep.subr.mxu0 0.0
    %132 = vmatpush2.xpose.msra.mxu0 0.0
    %133 = vmatprep.subr.mxu0 0.0
    %134 = vmatpush2.xpose.msra.mxu0 0.0
    %135 = vmatprep.subr.mxu0 0.0
    %136 = vmatpush2.xpose.msra.mxu0 0.0
    %137 = vmatprep.subr.mxu0 0.0
    %138 = vmatpush2.xpose.msra.mxu0 0.0
    %139 = vmatprep.subr.mxu0 0.0
    %140 = vmatpush2.xpose.msra.mxu0 0.0
    %141 = vmatprep.subr.mxu0 0.0
    %142 = vmatpush2.xpose.msra.mxu0 0.0
    %143 = vmatprep.subr.mxu0 0.0
    %144 = vmatpush2.xpose.msra.mxu0 0.0
    %145 = vmatprep.subr.mxu0 0.0
    %146 = vmatpush2.xpose.msra.mxu0 0.0
    %147 = vmatprep.subr.mxu0 0.0
    %148 = vmatpush2.xpose.msra.mxu0 0.0
    %149 = vmatprep.mubr.f32.mxu0 0.0
    %150 = vmatmul.mubr.f32.gmra.mxu0 %v71
    %v151 = vpop.f32.mrf.mxu0
    %v152 = vadd.f32 %v52, %v151
    %v153 = vpop.f32.mrf.mxu0
    %154 = vmatprep.mubr.f32.mxu0 0.0
    %155 = vmatmul.mubr.f32.gmra.mxu0 %v74
    %v156 = vpop.f32.mrf.mxu0
    %v157 = vadd.f32 %v57, %v156
    %v158 = vpop.f32.mrf.mxu0
    %159 = vmatprep.mubr.f32.mxu0 0.0
    %160 = vmatmul.mubr.f32.gmra.mxu0 %v77
    %v161 = vpop.f32.mrf.mxu0
    %v162 = vadd.f32 %v62, %v161
    %v163 = vpop.f32.mrf.mxu0
    %164 = vmatprep.mubr.f32.mxu0 0.0
    %165 = vmatmul.mubr.f32.gmra.mxu0 %v80
    %v166 = vpop.f32.mrf.mxu0
    %v167 = vadd.f32 %v67, %v166
    %v168 = vpop.f32.mrf.mxu0
    %169 = vdwg.mxu0
    %vm170 = vcmp.gt.f32.partialorder %v152, 0.0
    %vm171 = vcmp.gt.f32.partialorder %v157, 0.0
    %vm172 = vcmp.gt.f32.partialorder %v162, 0.0
    %vm173 = vcmp.gt.f32.partialorder %v167, 0.0
    %v174 = vmul.f32 %v152, 0.01
    %v175 = vmul.f32 %v157, 0.01
    %v176 = vmul.f32 %v162, 0.01
    %v177 = vmul.f32 %v167, 0.01
    %v178 = vsel %vm170, %v152, %v174
    %v179 = vsel %vm171, %v157, %v175
    %v180 = vsel %vm172, %v162, %v176
    %v181 = vsel %vm173, %v167, %v177
    %v182 = vld [vmem:[%s3] sm:$0xff]
    %v183 = vld [vmem:[%s3 + $0x8] sm:$0xff]
    %v184 = vld [vmem:[%s3 + $0x10] sm:$0xff]
    %v185 = vld [vmem:[%s3 + $0x18] sm:$0xff]
    %v186 = vld [vmem:[%s4] sm:$0xff]
    %v187 = vld [vmem:[%s4 + $0x8] sm:$0xff]
    %v188 = vld [vmem:[%s4 + $0x10] sm:$0xff]
    %v189 = vld [vmem:[%s4 + $0x18] sm:$0xff]
    %191 = vset.pattern.permute.xlu0 0
    %192 = vperm.xlu0 %191, %v186
    %v193 = vpop.permute.xlu0 %192
    %196 = vset.pattern.permute.xlu0 0
    %197 = vperm.xlu0 %196, %v187
    %v198 = vpop.permute.xlu0 %197
    %201 = vset.pattern.permute.xlu0 0
    %202 = vperm.xlu0 %201, %v188
    %v203 = vpop.permute.xlu0 %202
    %206 = vset.pattern.permute.xlu0 0
    %207 = vperm.xlu0 %206, %v189
    %v208 = vpop.permute.xlu0 %207
    %v211 = vsel %vm69, %v182, 0
    %v214 = vsel %vm69, %v183, 0
    %v217 = vsel %vm69, %v184, 0
    %v220 = vsel %vm69, %v185, 0
    %222 = vmatprep.subr.mxu0 0.0
    %223 = vmatpush1.msra.mxu0 0.0
    %224 = vmatprep.subr.mxu0 0.0
    %225 = vmatpush1.msra.mxu0 0.0
    %226 = vmatprep.subr.mxu0 0.0
    %227 = vmatpush1.msra.mxu0 0.0
    %228 = vmatprep.subr.mxu0 0.0
    %229 = vmatpush1.msra.mxu0 0.0
    %230 = vmatprep.subr.mxu0 0.0
    %231 = vmatpush1.msra.mxu0 0.0
    %232 = vmatprep.subr.mxu0 0.0
    %233 = vmatpush1.msra.mxu0 0.0
    %234 = vmatprep.subr.mxu0 0.0
    %235 = vmatpush1.msra.mxu0 0.0
    %236 = vmatprep.subr.mxu0 0.0
    %237 = vmatpush1.msra.mxu0 0.0
    %238 = vmatprep.subr.mxu0 0.0
    %239 = vmatpush1.msra.mxu0 0.0
    %240 = vmatprep.subr.mxu0 0.0
    %241 = vmatpush1.msra.mxu0 0.0
    %242 = vmatprep.subr.mxu0 0.0
    %243 = vmatpush1.msra.mxu0 0.0
    %244 = vmatprep.subr.mxu0 0.0
    %245 = vmatpush1.msra.mxu0 0.0
    %246 = vmatprep.subr.mxu0 0.0
    %247 = vmatpush1.msra.mxu0 %v181
    %248 = vmatprep.subr.mxu0 0.0
    %249 = vmatpush1.msra.mxu0 %v180
    %250 = vmatprep.subr.mxu0 0.0
    %251 = vmatpush1.msra.mxu0 %v179
    %252 = vmatprep.subr.mxu0 0.0
    %253 = vmatpush1.msra.mxu0 %v178
    %254 = vmatprep.subr.mxu0 0.0
    %255 = vmatpush2.msra.mxu0 0.0
    %256 = vmatprep.subr.mxu0 0.0
    %257 = vmatpush2.msra.mxu0 0.0
    %258 = vmatprep.subr.mxu0 0.0
    %259 = vmatpush2.msra.mxu0 0.0
    %260 = vmatprep.subr.mxu0 0.0
    %261 = vmatpush2.msra.mxu0 0.0
    %262 = vmatprep.subr.mxu0 0.0
    %263 = vmatpush2.msra.mxu0 0.0
    %264 = vmatprep.subr.mxu0 0.0
    %265 = vmatpush2.msra.mxu0 0.0
    %266 = vmatprep.subr.mxu0 0.0
    %267 = vmatpush2.msra.mxu0 0.0
    %268 = vmatprep.subr.mxu0 0.0
    %269 = vmatpush2.msra.mxu0 0.0
    %270 = vmatprep.subr.mxu0 0.0
    %271 = vmatpush2.msra.mxu0 0.0
    %272 = vmatprep.subr.mxu0 0.0
    %273 = vmatpush2.msra.mxu0 0.0
    %274 = vmatprep.subr.mxu0 0.0
    %275 = vmatpush2.msra.mxu0 0.0
    %276 = vmatprep.subr.mxu0 0.0
    %277 = vmatpush2.msra.mxu0 0.0
    %278 = vmatprep.subr.mxu0 0.0
    %279 = vmatpush2.msra.mxu0 0.0
    %280 = vmatprep.subr.mxu0 0.0
    %281 = vmatpush2.msra.mxu0 0.0
    %282 = vmatprep.subr.mxu0 0.0
    %283 = vmatpush2.msra.mxu0 0.0
    %284 = vmatprep.subr.mxu0 0.0
    %285 = vmatpush2.msra.mxu0 0.0
    %286 = vmatprep.mubr.f32.mxu0 0.0
    %287 = vmatmul.mubr.f32.gmra.mxu0 %v211
    %v288 = vpop.f32.mrf.mxu0
    %v289 = vadd.f32 %v193, %v288
    %v290 = vpop.f32.mrf.mxu0
    %291 = vmatprep.mubr.f32.mxu0 0.0
    %292 = vmatmul.mubr.f32.gmra.mxu0 %v214
    %v293 = vpop.f32.mrf.mxu0
    %v294 = vadd.f32 %v198, %v293
    %v295 = vpop.f32.mrf.mxu0
    %296 = vmatprep.mubr.f32.mxu0 0.0
    %297 = vmatmul.mubr.f32.gmra.mxu0 %v217
    %v298 = vpop.f32.mrf.mxu0
    %v299 = vadd.f32 %v203, %v298
    %v300 = vpop.f32.mrf.mxu0
    %301 = vmatprep.mubr.f32.mxu0 0.0
    %302 = vmatmul.mubr.f32.gmra.mxu0 %v220
    %v303 = vpop.f32.mrf.mxu0
    %v304 = vadd.f32 %v208, %v303
    %v305 = vpop.f32.mrf.mxu0
    %306 = vdwg.mxu0
    %vm307 = vcmp.gt.f32.partialorder %v289, 0.0
    %vm308 = vcmp.gt.f32.partialorder %v294, 0.0
    %vm309 = vcmp.gt.f32.partialorder %v299, 0.0
    %vm310 = vcmp.gt.f32.partialorder %v304, 0.0
    %v311 = vmul.f32 %v289, 0.01
    %v312 = vmul.f32 %v294, 0.01
    %v313 = vmul.f32 %v299, 0.01
    %v314 = vmul.f32 %v304, 0.01
    %v315 = vsel %vm307, %v289, %v311
    %v316 = vsel %vm308, %v294, %v312
    %v317 = vsel %vm309, %v299, %v313
    %v318 = vsel %vm310, %v304, %v314
    %v319 = vld [vmem:[%s5] sm:$0x1]
    %s320 = sld [smem:[#allocation2]]
    %v321 = vstv %s320
    %v323 = vsel %vm69, %v319, 0
    %325 = vmatprep.subr.mxu0 0.0
    %326 = vmatpush1.msra.mxu0 0.0
    %327 = vmatprep.subr.mxu0 0.0
    %328 = vmatpush1.msra.mxu0 0.0
    %329 = vmatprep.subr.mxu0 0.0
    %330 = vmatpush1.msra.mxu0 0.0
    %331 = vmatprep.subr.mxu0 0.0
    %332 = vmatpush1.msra.mxu0 0.0
    %333 = vmatprep.subr.mxu0 0.0
    %334 = vmatpush1.msra.mxu0 0.0
    %335 = vmatprep.subr.mxu0 0.0
    %336 = vmatpush1.msra.mxu0 0.0
    %337 = vmatprep.subr.mxu0 0.0
    %338 = vmatpush1.msra.mxu0 0.0
    %339 = vmatprep.subr.mxu0 0.0
    %340 = vmatpush1.msra.mxu0 0.0
    %341 = vmatprep.subr.mxu0 0.0
    %342 = vmatpush1.msra.mxu0 0.0
    %343 = vmatprep.subr.mxu0 0.0
    %344 = vmatpush1.msra.mxu0 0.0
    %345 = vmatprep.subr.mxu0 0.0
    %346 = vmatpush1.msra.mxu0 0.0
    %347 = vmatprep.subr.mxu0 0.0
    %348 = vmatpush1.msra.mxu0 0.0
    %349 = vmatprep.subr.mxu0 0.0
    %350 = vmatpush1.msra.mxu0 %v318
    %351 = vmatprep.subr.mxu0 0.0
    %352 = vmatpush1.msra.mxu0 %v317
    %353 = vmatprep.subr.mxu0 0.0
    %354 = vmatpush1.msra.mxu0 %v316
    %355 = vmatprep.subr.mxu0 0.0
    %356 = vmatpush1.msra.mxu0 %v315
    %357 = vmatprep.subr.mxu0 0.0
    %358 = vmatpush2.msra.mxu0 0.0
    %359 = vmatprep.subr.mxu0 0.0
    %360 = vmatpush2.msra.mxu0 0.0
    %361 = vmatprep.subr.mxu0 0.0
    %362 = vmatpush2.msra.mxu0 0.0
    %363 = vmatprep.subr.mxu0 0.0
    %364 = vmatpush2.msra.mxu0 0.0
    %365 = vmatprep.subr.mxu0 0.0
    %366 = vmatpush2.msra.mxu0 0.0
    %367 = vmatprep.subr.mxu0 0.0
    %368 = vmatpush2.msra.mxu0 0.0
    %369 = vmatprep.subr.mxu0 0.0
    %370 = vmatpush2.msra.mxu0 0.0
    %371 = vmatprep.subr.mxu0 0.0
    %372 = vmatpush2.msra.mxu0 0.0
    %373 = vmatprep.subr.mxu0 0.0
    %374 = vmatpush2.msra.mxu0 0.0
    %375 = vmatprep.subr.mxu0 0.0
    %376 = vmatpush2.msra.mxu0 0.0
    %377 = vmatprep.subr.mxu0 0.0
    %378 = vmatpush2.msra.mxu0 0.0
    %379 = vmatprep.subr.mxu0 0.0
    %380 = vmatpush2.msra.mxu0 0.0
    %381 = vmatprep.subr.mxu0 0.0
    %382 = vmatpush2.msra.mxu0 0.0
    %383 = vmatprep.subr.mxu0 0.0
    %384 = vmatpush2.msra.mxu0 0.0
    %385 = vmatprep.subr.mxu0 0.0
    %386 = vmatpush2.msra.mxu0 0.0
    %387 = vmatprep.subr.mxu0 0.0
    %388 = vmatpush2.msra.mxu0 0.0
    %389 = vmatprep.mubr.f32.mxu0 0.0
    %390 = vmatmul.mubr.f32.gmra.mxu0 %v323
    %v391 = vpop.f32.mrf.mxu0
    %v392 = vadd.f32 %v321, %v391
    %v393 = vpop.f32.mrf.mxu0
    %394 = vdwg.mxu0
    %vm395 = vcmask 57344
    %396 = vst.msk [vmem:[#allocation6] sm:$0x1] %vm395, %v392
    // Predicated region
    $region34: #{tpu_custom_call.1} parent=1 // pred_check
      _
    $region35: #{tpu_custom_call.1} parent=1 // pred_check_branch
      %398 = sbr.rel (0) target = $region37
    $region36: #{tpu_custom_call.1} parent=1 // pred_region
      %s400 = ssub.s32 16, 16
      %401 = vsyncadd [#allocation5], %s400
      %s403 = sshll.u32 [#allocation6], 4
      %s404 = int_to_ptr.vmem [resolvable:$true] %s403
      %406 = dma.vmem_to_hbm [thread:$0]  %s404, 16, %s7, [#allocation5]
    $region37: #{tpu_custom_call.1} parent=1 // pred_fallthru
      _
    // Predicated region
    $region38: #{tpu_custom_call.1} parent=1 // pred_check
      _
    $region39: #{tpu_custom_call.1} parent=1 // pred_check_branch
      %408 = sbr.rel (0) target = $region41
    $region40: #{tpu_custom_call.1} parent=1 // pred_region
      %409 = dma.done [#allocation5], 16
    $region41: #{tpu_custom_call.1} parent=1 // pred_fallthru
      _
    %410 = vsyncpa [#allocation4], 1
    %411 = vsyncpa [#allocation5], 1

</llo_original>
